<compile_context>
chip_gen: v6e
topology: v6e:2x2x1
jax: 0.10.0
libtpu: 0.0.40
codegen_flags: <defaults>
</compile_context>

<pallas_src>
import functools

import jax
import jax.numpy as jnp
import numpy as np
from jax.experimental import pallas as pl
from jax.experimental.pallas import tpu as pltpu


def adaptive_bins(size_in: int, size_out: int = 4):
    """PyTorch AdaptiveAvg/MaxPool2d bin edges: [floor(i*S/O), ceil((i+1)*S/O))."""
    bins = []
    for i in range(size_out):
        start = (i * size_in) // size_out
        end = -(-((i + 1) * size_in) // size_out)  # ceil
        bins.append((start, end))
    return bins


def linearize_kernel(patches_ref, w_ref, pool_ref, gamma_ref, beta_ref, out_ref, *,
                     mode, n_batch, p_spatial, w_out, h_bins, w_bins, eps):
    """Shapes:
       patches_ref: (CK, NP_pad)  bf16, lane = n*P + h_out*Wo + w_out, zero padded
       w_ref:       (C_out, CK)   bf16
       pool_ref:    (NP_pad, N*16+1) f32 avg mode (block-diag avg weights + ones col)
                    (NP_pad, 1)      f32 max mode (ones col only)
       gamma/beta:  (C_out, 1) f32
       out_ref:     (C_out, N*16) f32, column = n*16 + i*4 + j
    """
    cnt = float(n_batch * p_spatial)
    inv_cnt = 1.0 / cnt

    # ---- ReLU + Conv2d as one lane-dense MXU matmul (ReLU commutes with im2col) ----
    act = jnp.maximum(patches_ref[...], 0.0)                        # (CK, NP_pad) bf16
    y = jnp.dot(w_ref[...], act,
                preferred_element_type=jnp.float32)                 # (C_out, NP_pad) f32

    # ---- fused pooling-weights / batch-sum matmul (MXU) ----
    pool = pool_ref[...]                                            # (NP_pad, ncols) f32
    ncols = pool.shape[1]
    r = jnp.dot(y, pool, preferred_element_type=jnp.float32)        # (C_out, ncols)
    s = r[:, ncols - 1:ncols]                                       # per-channel sum (C_out, 1)

    # ---- BatchNorm2d (training-mode stats), two-pass variance in f32 ----
    mean = s * inv_cnt                                              # (C_out, 1)
    yc = y - mean                                                   # pads become -mean ...
    ones_col = pool[:, ncols - 1:ncols]                             # ... masked by ones col
    ss = jnp.dot(yc * yc, ones_col,
                 preferred_element_type=jnp.float32)                # (C_out, 1)
    var = ss * inv_cnt                                              # biased variance
    inv_std = jax.lax.rsqrt(var + eps)
    scale = gamma_ref[...] * inv_std                                # (C_out, 1)
    shift = beta_ref[...] - mean * scale                            # (C_out, 1)
    # TODO(synk): torch training-mode BN also updates running_mean/running_var
    # buffers; that stateful side effect is not materialized in this pure forward.

    if mode == 'avg':
        # Pool rows sum to 1, so pooling commutes with the BN affine transform.
        pooled = r[:, :ncols - 1]                                   # (C_out, N*16)
        out_ref[...] = pooled * scale + shift
    else:
        ynorm = y * scale + shift                                   # (C_out, NP_pad), one VPU pass
        cols = []
        for n in range(n_batch):                                    # static, small: unrolled
            base = n * p_spatial
            for (hs, he) in h_bins:
                for (ws, we) in w_bins:
                    off = base + hs * w_out
                    blk = ynorm[:, off + ws:off + we]               # (C_out, we-ws)
                    for h in range(hs + 1, he):
                        off = base + h * w_out
                        blk = jnp.maximum(blk, ynorm[:, off + ws:off + we])
                    cols.append(jnp.max(blk, axis=1, keepdims=True))  # (C_out, 1)
        out_ref[...] = jnp.concatenate(cols, axis=1)                # (C_out, N*16)


def linearize_forward(x, conv_w, gamma, beta, *, kernel_size, stride, mode):
    """x: (N, C_in, H, W) f32 NCHW; conv_w: (C_out, C_in, KH, KW) torch layout."""
    N, C_in, H, W = x.shape
    KH = KW = kernel_size
    C_out = conv_w.shape[0]
    Ho = (H - KH) // stride + 1
    Wo = (W - KW) // stride + 1
    P = Ho * Wo
    CK = C_in * KH * KW
    NP = N * P
    NP_pad = max(256, -(-NP // 256) * 256)      # lane-dense + MXU-tile aligned

    # ---- im2col -> (CK, NP_pad): lane axis = (n, h_out, w_out), zero padded ----
    cols = []
    for kh in range(KH):
        for kw in range(KW):
            cols.append(x[:, :, kh:kh + stride * Ho:stride, kw:kw + stride * Wo:stride])
    pat = jnp.stack(cols, axis=2).reshape(N, CK, Ho, Wo)    # CK order = (c_in, kh, kw)
    patches_t = pat.transpose(1, 0, 2, 3).reshape(CK, NP)
    patches_t = jnp.pad(patches_t, ((0, 0), (0, NP_pad - NP))).astype(jnp.bfloat16)

    w_flat = conv_w.reshape(C_out, CK).astype(jnp.bfloat16)         # (C_out, CK)

    # ---- static pooling operator (+ trailing ones column for the batch sum) ----
    hb, wb = adaptive_bins(Ho), adaptive_bins(Wo)
    n_pool_cols = N * 16 + 1 if mode == 'avg' else 1
    pool_np = np.zeros((NP_pad, n_pool_cols), np.float32)
    pool_np[:NP, -1] = 1.0                                          # batch-sum column
    if mode == 'avg':
        for n in range(N):
            for i, (hs, he) in enumerate(hb):
                for j, (ws, we) in enumerate(wb):
                    inv_area = 1.0 / float((he - hs) * (we - ws))
                    for h in range(hs, he):
                        for w_ in range(ws, we):
                            pool_np[n * P + h * Wo + w_, n * 16 + i * 4 + j] = inv_area
    pool_arr = jnp.asarray(pool_np)

    gamma2d = gamma.reshape(C_out, 1).astype(jnp.float32)
    beta2d = beta.reshape(C_out, 1).astype(jnp.float32)

    kernel = functools.partial(
        linearize_kernel, mode=mode, n_batch=N, p_spatial=P, w_out=Wo,
        h_bins=tuple(hb), w_bins=tuple(wb), eps=1e-5)

    out = pl.pallas_call(
        kernel,
        out_shape=jax.ShapeDtypeStruct((C_out, N * 16), jnp.float32),
        in_specs=[pl.BlockSpec(memory_space=pltpu.MemorySpace.VMEM)] * 5,
        out_specs=pl.BlockSpec(memory_space=pltpu.MemorySpace.VMEM),
        compiler_params=pltpu.CompilerParams(vmem_limit_bytes=32 * 1024 * 1024),
    )(patches_t, w_flat, pool_arr, gamma2d, beta2d)

    # (C_out, N*16) -> (N, C_out*16): matches torch's view(N, -1) on (N, C_out, 4, 4).
    return out.reshape(C_out, N, 16).transpose(1, 0, 2).reshape(N, C_out * 16)


def linearize_reference(x, conv_w, gamma, beta, *, kernel_size, stride, mode):
    """Pure-JAX f32 reference mirroring the torch forward."""
    y = jnp.maximum(x, 0.0)
    y = jax.lax.conv_general_dilated(
        y, conv_w, window_strides=(stride, stride), padding='VALID',
        dimension_numbers=('NCHW', 'OIHW', 'NCHW'))
    mean = y.mean(axis=(0, 2, 3), keepdims=True)
    var = ((y - mean) ** 2).mean(axis=(0, 2, 3), keepdims=True)
    y = (y - mean) * jax.lax.rsqrt(var + 1e-5)
    y = y * gamma.reshape(1, -1, 1, 1) + beta.reshape(1, -1, 1, 1)
    Ho, Wo = y.shape[2], y.shape[3]
    hb, wb = adaptive_bins(Ho), adaptive_bins(Wo)
    rows = []
    for (hs, he) in hb:
        cols_ = []
        for (ws, we) in wb:
            blk = y[:, :, hs:he, ws:we]
            cols_.append(blk.mean(axis=(2, 3)) if mode == 'avg' else blk.max(axis=(2, 3)))
        rows.append(jnp.stack(cols_, axis=-1))
    pooled = jnp.stack(rows, axis=-2)                 # (N, C_out, 4, 4)
    return pooled.reshape(x.shape[0], -1)


if __name__ == "__main__":
    # Module hyper-parameters: Linearize(kernel_size, mode, C_in, n_lin, stride, affine)
    kernel_size, C_in, n_lin, stride = 3, 4, 64, 1
    C_out = n_lin // 16
    N, H, W = 2, 16, 16

    key = jax.random.PRNGKey(0)
    kx, kw = jax.random.split(key, 2)
    x = jax.random.normal(kx, (N, C_in, H, W), jnp.float32)

    fan_in = C_in * kernel_size * kernel_size
    conv_w = jax.random.normal(kw, (C_out, C_in, kernel_size, kernel_size),
                               jnp.float32) / jnp.sqrt(float(fan_in))
    # BatchNorm2d affine init (gamma=1, beta=0); identical math when affine=False.
    gamma = jnp.ones((C_out,), jnp.float32)
    beta = jnp.zeros((C_out,), jnp.float32)

    for mode in ('avg', 'max'):
        out = linearize_forward(x, conv_w, gamma, beta,
                                kernel_size=kernel_size, stride=stride, mode=mode)
        out = jax.block_until_ready(out)
        ref = linearize_reference(x, conv_w, gamma, beta,
                                  kernel_size=kernel_size, stride=stride, mode=mode)
        ref = jax.block_until_ready(ref)
        assert out.shape == (N, C_out * 16), out.shape
        np.testing.assert_allclose(np.asarray(out), np.asarray(ref),
                                   atol=5e-2, rtol=5e-2)
    print("KERNEL_OK")
</pallas_src>

<mosaic_0001>
module attributes {stable_mosaic.version = 11 : i64} {
  func.func @linearize_kernel(%arg0: memref<36x512xbf16, #tpu.memory_space<vmem>>, %arg1: memref<4x36xbf16, #tpu.memory_space<vmem>>, %arg2: memref<512x33xf32, #tpu.memory_space<vmem>>, %arg3: memref<4x1xf32, #tpu.memory_space<vmem>>, %arg4: memref<4x1xf32, #tpu.memory_space<vmem>>, %arg5: memref<4x32xf32, #tpu.memory_space<vmem>>) attributes {dimension_semantics = [], scalar_prefetch = 0 : i64, scratch_operands = 0 : i64, tpu.core_type = #tpu.core_type<tc>} {
    %c0 = arith.constant 0 : index
    %c0_0 = arith.constant 0 : index
    %0 = vector.load %arg0[%c0, %c0_0] : memref<36x512xbf16, #tpu.memory_space<vmem>>, vector<36x512xbf16>
    %cst = arith.constant 0.000000e+00 : bf16
    %1 = vector.broadcast %cst : bf16 to vector<36x512xbf16>
    %2 = arith.maximumf %0, %1 : vector<36x512xbf16>
    %c0_1 = arith.constant 0 : index
    %c0_2 = arith.constant 0 : index
    %3 = vector.load %arg1[%c0_1, %c0_2] : memref<4x36xbf16, #tpu.memory_space<vmem>>, vector<4x36xbf16>
    %cst_3 = arith.constant dense<0.000000e+00> : vector<4x512xf32>
    %4 = tpu.matmul %3, %2, %cst_3 {dimension_numbers = #tpu.dot_dimension_numbers<[1], [0], [0], [1], [0, 0, 1, 1], [], []>} : vector<4x36xbf16>, vector<36x512xbf16>, vector<4x512xf32> -> vector<4x512xf32>
    %c0_4 = arith.constant 0 : index
    %c0_5 = arith.constant 0 : index
    %5 = vector.load %arg2[%c0_4, %c0_5] : memref<512x33xf32, #tpu.memory_space<vmem>>, vector<512x33xf32>
    %cst_6 = arith.constant dense<0.000000e+00> : vector<4x33xf32>
    %6 = tpu.matmul %4, %5, %cst_6 {dimension_numbers = #tpu.dot_dimension_numbers<[1], [0], [0], [1], [0, 0, 1, 1], [], []>} : vector<4x512xf32>, vector<512x33xf32>, vector<4x33xf32> -> vector<4x33xf32>
    %7 = vector.extract_strided_slice %6 {offsets = [0, 32], sizes = [4, 1], strides = [1, 1]} : vector<4x33xf32> to vector<4x1xf32>
    %cst_7 = arith.constant 0.00255102036 : f32
    %8 = vector.broadcast %cst_7 : f32 to vector<4x1xf32>
    %9 = arith.mulf %7, %8 : vector<4x1xf32>
    %10 = vector.broadcast %9 : vector<4x1xf32> to vector<4x512xf32>
    %11 = arith.subf %4, %10 : vector<4x512xf32>
    %12 = vector.extract_strided_slice %5 {offsets = [0, 32], sizes = [512, 1], strides = [1, 1]} : vector<512x33xf32> to vector<512x1xf32>
    %13 = arith.mulf %11, %11 : vector<4x512xf32>
    %cst_8 = arith.constant dense<0.000000e+00> : vector<4x1xf32>
    %14 = tpu.matmul %13, %12, %cst_8 {dimension_numbers = #tpu.dot_dimension_numbers<[1], [0], [0], [1], [0, 0, 1, 1], [], []>} : vector<4x512xf32>, vector<512x1xf32>, vector<4x1xf32> -> vector<4x1xf32>
    %cst_9 = arith.constant 0.00255102036 : f32
    %15 = vector.broadcast %cst_9 : f32 to vector<4x1xf32>
    %16 = arith.mulf %14, %15 : vector<4x1xf32>
    %cst_10 = arith.constant 9.99999974E-6 : f32
    %17 = vector.broadcast %cst_10 : f32 to vector<4x1xf32>
    %18 = arith.addf %16, %17 : vector<4x1xf32>
    %19 = math.rsqrt %18 : vector<4x1xf32>
    %c0_11 = arith.constant 0 : index
    %c0_12 = arith.constant 0 : index
    %20 = vector.load %arg3[%c0_11, %c0_12] : memref<4x1xf32, #tpu.memory_space<vmem>>, vector<4x1xf32>
    %21 = arith.mulf %20, %19 : vector<4x1xf32>
    %c0_13 = arith.constant 0 : index
    %c0_14 = arith.constant 0 : index
    %22 = vector.load %arg4[%c0_13, %c0_14] : memref<4x1xf32, #tpu.memory_space<vmem>>, vector<4x1xf32>
    %23 = arith.mulf %9, %21 : vector<4x1xf32>
    %24 = arith.subf %22, %23 : vector<4x1xf32>
    %25 = vector.extract_strided_slice %6 {offsets = [0, 0], sizes = [4, 32], strides = [1, 1]} : vector<4x33xf32> to vector<4x32xf32>
    %26 = vector.broadcast %21 : vector<4x1xf32> to vector<4x32xf32>
    %27 = arith.mulf %25, %26 : vector<4x32xf32>
    %28 = vector.broadcast %24 : vector<4x1xf32> to vector<4x32xf32>
    %29 = arith.addf %27, %28 : vector<4x32xf32>
    %c0_15 = arith.constant 0 : index
    %c0_16 = arith.constant 0 : index
    %30 = vector.load %arg5[%c0_15, %c0_16] : memref<4x32xf32, #tpu.memory_space<vmem>>, vector<4x32xf32>
    tpu.vector_store %arg5[%c0_15, %c0_16], %29 {strides = array<i32>} : memref<4x32xf32, #tpu.memory_space<vmem>>, vector<4x32xf32>,
    return
  }
}

</mosaic_0001>

<llo_original>
// kernel: tpu_custom_call.1
$region0: #{tpu_custom_call.1}
  #allocation0 [shape = 'u32[]', space=smem, size = 0x4, offset = 0x4, fixed_abs, tag = 'smem constant byte address 0x4 - core index']
  #allocation1 [shape = 'u32[144,128]{1,0:T(1,128)}', space=vmem, size = 0x12000, scoped, tag = 'internal scratch']
  %s0 = inlined_call_operand.vmem [shape: bf16[36,512], index: 0, kind: input, shape index: {}]
  %s1 = inlined_call_operand.vmem [shape: bf16[4,36], index: 1, kind: input, shape index: {}]
  %s2 = inlined_call_operand.vmem [shape: f32[512,33], index: 2, kind: input, shape index: {}]
  %s3 = inlined_call_operand.vmem [shape: f32[4,1], index: 3, kind: input, shape index: {}]
  %s4 = inlined_call_operand.vmem [shape: f32[4,1], index: 4, kind: input, shape index: {}]
  %s5 = inlined_call_operand.hbm [shape: f32[4,32], index: 5, kind: output, shape index: {}]
  %s6 = sld [smem:[#allocation0]]
  $region30: #{tpu_custom_call.1} parent=0
    _
  %s8 = ssub.s32 1, %s6
  %s9 = scalar_select 0, %s8, %s6
  $region1: #{tpu_custom_call.1} parent=0
    #allocation2 [shape = 'u8[2048]{0}', space=vmem, size = 0x800, scoped, tag = 'output window, operand 0, single buffered']
    #allocation3 [shape = 's32[1]{0}', space=sflag, size = 0x4, scoped, tag = 'scoped memory for tpu_custom_call.1']
    %10 = vsyncpa [#allocation3], 0
    // Predicated region
    $region2: #{tpu_custom_call.1} parent=1 // pred_check
      _
    $region3: #{tpu_custom_call.1} parent=1 // pred_check_branch
      %12 = sbr.rel (0) target = $region5
    $region4: #{tpu_custom_call.1} parent=1 // pred_region
      _
    $region5: #{tpu_custom_call.1} parent=1 // pred_fallthru
      _
    // Predicated region
    $region6: #{tpu_custom_call.1} parent=1 // pred_check
      _
    $region7: #{tpu_custom_call.1} parent=1 // pred_check_branch
      %14 = sbr.rel (0) target = $region9
    $region8: #{tpu_custom_call.1} parent=1 // pred_region
      _
    $region9: #{tpu_custom_call.1} parent=1 // pred_fallthru
      _
    // Predicated region
    $region10: #{tpu_custom_call.1} parent=1 // pred_check
      _
    $region11: #{tpu_custom_call.1} parent=1 // pred_check_branch
      %16 = sbr.rel (0) target = $region13
    $region12: #{tpu_custom_call.1} parent=1 // pred_region
      _
    $region13: #{tpu_custom_call.1} parent=1 // pred_fallthru
      _
    // Predicated region
    $region14: #{tpu_custom_call.1} parent=1 // pred_check
      _
    $region15: #{tpu_custom_call.1} parent=1 // pred_check_branch
      %18 = sbr.rel (0) target = $region17
    $region16: #{tpu_custom_call.1} parent=1 // pred_region
      _
    $region17: #{tpu_custom_call.1} parent=1 // pred_fallthru
      _
    // Predicated region
    $region18: #{tpu_custom_call.1} parent=1 // pred_check
      _
    $region19: #{tpu_custom_call.1} parent=1 // pred_check_branch
      %20 = sbr.rel (0) target = $region21
    $region20: #{tpu_custom_call.1} parent=1 // pred_region
      _
    $region21: #{tpu_custom_call.1} parent=1 // pred_fallthru
      _
    %v22 = vld [vmem:[%s0] sm:$0xff]
    %v23 = vld [vmem:[%s0 + $0x8] sm:$0xff]
    %v24 = vld [vmem:[%s0 + $0x10] sm:$0xff]
    %v25 = vld [vmem:[%s0 + $0x18] sm:$0xff]
    %v26 = vld [vmem:[%s0 + $0x20] sm:$0xff]
    %v27 = vld [vmem:[%s0 + $0x28] sm:$0xff]
    %v28 = vld [vmem:[%s0 + $0x30] sm:$0xff]
    %v29 = vld [vmem:[%s0 + $0x38] sm:$0xff]
    %v30 = vld [vmem:[%s0 + $0x40] sm:$0x33]
    %v31 = vld [vmem:[%s0 + $0x48] sm:$0x33]
    %v32 = vmax.bf16 %v22, 0
    %v33 = vmax.bf16 %v23, 0
    %v34 = vmax.bf16 %v24, 0
    %v35 = vmax.bf16 %v25, 0
    %v36 = vmax.bf16 %v26, 0
    %v37 = vmax.bf16 %v27, 0
    %v38 = vmax.bf16 %v28, 0
    %v39 = vmax.bf16 %v29, 0
    %v40 = vmax.bf16 %v30, 0
    %v41 = vmax.bf16 %v31, 0
    %v42 = vld [vmem:[%s1] sm:$0x3]
    %v53 = vunpack.c.l.b16 %v32
    %v54 = vunpack.c.h.b16 %v32
    %v55 = vunpack.c.l.b16 %v33
    %v56 = vunpack.c.h.b16 %v33
    %v57 = vunpack.c.l.b16 %v34
    %v58 = vunpack.c.h.b16 %v34
    %v59 = vunpack.c.l.b16 %v35
    %v60 = vunpack.c.h.b16 %v35
    %v61 = vunpack.c.l.b16 %v36
    %v62 = vunpack.c.h.b16 %v36
    %v63 = vunpack.c.l.b16 %v37
    %v64 = vunpack.c.h.b16 %v37
    %v65 = vunpack.c.l.b16 %v38
    %v66 = vunpack.c.h.b16 %v38
    %v67 = vunpack.c.l.b16 %v39
    %v68 = vunpack.c.h.b16 %v39
    %v69 = vunpack.c.l.b16 %v40
    %v70 = vunpack.c.h.b16 %v40
    %v71 = vunpack.c.l.b16 %v41
    %v72 = vunpack.c.h.b16 %v41
    %v73 = vpack.c.b16 %v57, %v53
    %v74 = vpack.c.b16 %v58, %v54
    %v75 = vpack.c.b16 %v59, %v55
    %v76 = vpack.c.b16 %v60, %v56
    %v77 = vpack.c.b16 %v65, %v61
    %v78 = vpack.c.b16 %v66, %v62
    %v79 = vpack.c.b16 %v67, %v63
    %v80 = vpack.c.b16 %v68, %v64
    %v81 = vpack.c.b16 %v69, %v69
    %v82 = vpack.c.b16 %v70, %v70
    %v83 = vpack.c.b16 %v71, %v71
    %v84 = vpack.c.b16 %v72, %v72
    %vm93 = vcmask 293888
    %v95 = vsel %vm93, %v42, 0
    %vm97 = vcmask 1041408
    %v99 = vsel %vm97, %v81, 0
    %v102 = vsel %vm97, %v82, 0
    %v105 = vsel %vm97, %v83, 0
    %v108 = vsel %vm97, %v84, 0
    %110 = vmatprep.subr.bf16.mxu0 0
    %111 = vmatpush1.bf16.msra.mxu0 0
    %112 = vmatprep.subr.bf16.mxu0 0
    %113 = vmatpush1.bf16.msra.mxu0 0
    %114 = vmatprep.subr.bf16.mxu0 0
    %115 = vmatpush1.bf16.msra.mxu0 0
    %116 = vmatprep.subr.bf16.mxu0 0
    %117 = vmatpush1.bf16.msra.mxu0 0
    %118 = vmatprep.subr.bf16.mxu0 0
    %119 = vmatpush1.bf16.msra.mxu0 0
    %120 = vmatprep.subr.bf16.mxu0 %v102
    %121 = vmatpush1.bf16.msra.mxu0 %v99
    %122 = vmatprep.subr.bf16.mxu0 %v78
    %123 = vmatpush1.bf16.msra.mxu0 %v77
    %124 = vmatprep.subr.bf16.mxu0 %v74
    %125 = vmatpush1.bf16.msra.mxu0 %v73
    %126 = vmatprep.subr.bf16.mxu0 0
    %127 = vmatpush2.bf16.msra.mxu0 0
    %128 = vmatprep.subr.bf16.mxu0 0
    %129 = vmatpush2.bf16.msra.mxu0 0
    %130 = vmatprep.subr.bf16.mxu0 0
    %131 = vmatpush2.bf16.msra.mxu0 0
    %132 = vmatprep.subr.bf16.mxu0 0
    %133 = vmatpush2.bf16.msra.mxu0 0
    %134 = vmatprep.subr.bf16.mxu0 0
    %135 = vmatpush2.bf16.msra.mxu0 0
    %136 = vmatprep.subr.bf16.mxu0 0
    %137 = vmatpush2.bf16.msra.mxu0 0
    %138 = vmatprep.subr.bf16.mxu0 0
    %139 = vmatpush2.bf16.msra.mxu0 0
    %140 = vmatprep.subr.bf16.mxu0 0
    %141 = vmatpush2.bf16.msra.mxu0 0
    %142 = vmatprep.mubr.bf16.mxu0 0
    %143 = vmatmul.mubr.bf16.gmra.mxu0 %v95
    %v144 = vpop.f32.mrf.mxu0
    %v145 = vadd.f32 0.0, %v144
    %v146 = vpop.f32.mrf.mxu0
    %v147 = vadd.f32 0.0, %v146
    %v148 = vpop.f32.mrf.mxu0
    %v149 = vpop.f32.mrf.mxu0
    %150 = vdwg.mxu0
    %151 = vmatprep.subr.bf16.mxu0 0
    %152 = vmatpush1.bf16.msra.mxu0 0
    %153 = vmatprep.subr.bf16.mxu0 0
    %154 = vmatpush1.bf16.msra.mxu0 0
    %155 = vmatprep.subr.bf16.mxu0 0
    %156 = vmatpush1.bf16.msra.mxu0 0
    %157 = vmatprep.subr.bf16.mxu0 0
    %158 = vmatpush1.bf16.msra.mxu0 0
    %159 = vmatprep.subr.bf16.mxu0 0
    %160 = vmatpush1.bf16.msra.mxu0 0
    %161 = vmatprep.subr.bf16.mxu0 %v108
    %162 = vmatpush1.bf16.msra.mxu0 %v105
    %163 = vmatprep.subr.bf16.mxu0 %v80
    %164 = vmatpush1.bf16.msra.mxu0 %v79
    %165 = vmatprep.subr.bf16.mxu0 %v76
    %166 = vmatpush1.bf16.msra.mxu0 %v75
    %167 = vmatprep.subr.bf16.mxu0 0
    %168 = vmatpush2.bf16.msra.mxu0 0
    %169 = vmatprep.subr.bf16.mxu0 0
    %170 = vmatpush2.bf16.msra.mxu0 0
    %171 = vmatprep.subr.bf16.mxu0 0
    %172 = vmatpush2.bf16.msra.mxu0 0
    %173 = vmatprep.subr.bf16.mxu0 0
    %174 = vmatpush2.bf16.msra.mxu0 0
    %175 = vmatprep.subr.bf16.mxu0 0
    %176 = vmatpush2.bf16.msra.mxu0 0
    %177 = vmatprep.subr.bf16.mxu0 0
    %178 = vmatpush2.bf16.msra.mxu0 0
    %179 = vmatprep.subr.bf16.mxu0 0
    %180 = vmatpush2.bf16.msra.mxu0 0
    %181 = vmatprep.subr.bf16.mxu0 0
    %182 = vmatpush2.bf16.msra.mxu0 0
    %183 = vmatprep.mubr.bf16.mxu0 0
    %184 = vmatmul.mubr.bf16.gmra.mxu0 %v95
    %v185 = vpop.f32.mrf.mxu0
    %v186 = vadd.f32 0.0, %v185
    %v187 = vpop.f32.mrf.mxu0
    %v188 = vadd.f32 0.0, %v187
    %v189 = vpop.f32.mrf.mxu0
    %v190 = vpop.f32.mrf.mxu0
    %191 = vdwg.mxu0
    %v192 = vld [vmem:[%s2] sm:$0xff]
    %v193 = vld [vmem:[%s2 + $0x8] sm:$0xff]
    %v194 = vld [vmem:[%s2 + $0x10] sm:$0xff]
    %v195 = vld [vmem:[%s2 + $0x18] sm:$0xff]
    %v196 = vld [vmem:[%s2 + $0x20] sm:$0xff]
    %v197 = vld [vmem:[%s2 + $0x28] sm:$0xff]
    %v198 = vld [vmem:[%s2 + $0x30] sm:$0xff]
    %v199 = vld [vmem:[%s2 + $0x38] sm:$0xff]
    %v200 = vld [vmem:[%s2 + $0x40] sm:$0xff]
    %v201 = vld [vmem:[%s2 + $0x48] sm:$0xff]
    %v202 = vld [vmem:[%s2 + $0x50] sm:$0xff]
    %v203 = vld [vmem:[%s2 + $0x58] sm:$0xff]
    %v204 = vld [vmem:[%s2 + $0x60] sm:$0xff]
    %v205 = vld [vmem:[%s2 + $0x68] sm:$0xff]
    %v206 = vld [vmem:[%s2 + $0x70] sm:$0xff]
    %v207 = vld [vmem:[%s2 + $0x78] sm:$0xff]
    %v208 = vld [vmem:[%s2 + $0x80] sm:$0xff]
    %v209 = vld [vmem:[%s2 + $0x88] sm:$0xff]
    %v210 = vld [vmem:[%s2 + $0x90] sm:$0xff]
    %v211 = vld [vmem:[%s2 + $0x98] sm:$0xff]
    %v212 = vld [vmem:[%s2 + $0xa0] sm:$0xff]
    %v213 = vld [vmem:[%s2 + $0xa8] sm:$0xff]
    %v214 = vld [vmem:[%s2 + $0xb0] sm:$0xff]
    %v215 = vld [vmem:[%s2 + $0xb8] sm:$0xff]
    %v216 = vld [vmem:[%s2 + $0xc0] sm:$0xff]
    %v217 = vld [vmem:[%s2 + $0xc8] sm:$0xff]
    %v218 = vld [vmem:[%s2 + $0xd0] sm:$0xff]
    %v219 = vld [vmem:[%s2 + $0xd8] sm:$0xff]
    %v220 = vld [vmem:[%s2 + $0xe0] sm:$0xff]
    %v221 = vld [vmem:[%s2 + $0xe8] sm:$0xff]
    %v222 = vld [vmem:[%s2 + $0xf0] sm:$0xff]
    %v223 = vld [vmem:[%s2 + $0xf8] sm:$0xff]
    %v224 = vld [vmem:[%s2 + $0x100] sm:$0xff]
    %v225 = vld [vmem:[%s2 + $0x108] sm:$0xff]
    %v226 = vld [vmem:[%s2 + $0x110] sm:$0xff]
    %v227 = vld [vmem:[%s2 + $0x118] sm:$0xff]
    %v228 = vld [vmem:[%s2 + $0x120] sm:$0xff]
    %v229 = vld [vmem:[%s2 + $0x128] sm:$0xff]
    %v230 = vld [vmem:[%s2 + $0x130] sm:$0xff]
    %v231 = vld [vmem:[%s2 + $0x138] sm:$0xff]
    %v232 = vld [vmem:[%s2 + $0x140] sm:$0xff]
    %v233 = vld [vmem:[%s2 + $0x148] sm:$0xff]
    %v234 = vld [vmem:[%s2 + $0x150] sm:$0xff]
    %v235 = vld [vmem:[%s2 + $0x158] sm:$0xff]
    %v236 = vld [vmem:[%s2 + $0x160] sm:$0xff]
    %v237 = vld [vmem:[%s2 + $0x168] sm:$0xff]
    %v238 = vld [vmem:[%s2 + $0x170] sm:$0xff]
    %v239 = vld [vmem:[%s2 + $0x178] sm:$0xff]
    %v240 = vld [vmem:[%s2 + $0x180] sm:$0xff]
    %v241 = vld [vmem:[%s2 + $0x188] sm:$0xff]
    %v242 = vld [vmem:[%s2 + $0x190] sm:$0xff]
    %v243 = vld [vmem:[%s2 + $0x198] sm:$0xff]
    %v244 = vld [vmem:[%s2 + $0x1a0] sm:$0xff]
    %v245 = vld [vmem:[%s2 + $0x1a8] sm:$0xff]
    %v246 = vld [vmem:[%s2 + $0x1b0] sm:$0xff]
    %v247 = vld [vmem:[%s2 + $0x1b8] sm:$0xff]
    %v248 = vld [vmem:[%s2 + $0x1c0] sm:$0xff]
    %v249 = vld [vmem:[%s2 + $0x1c8] sm:$0xff]
    %v250 = vld [vmem:[%s2 + $0x1d0] sm:$0xff]
    %v251 = vld [vmem:[%s2 + $0x1d8] sm:$0xff]
    %v252 = vld [vmem:[%s2 + $0x1e0] sm:$0xff]
    %v253 = vld [vmem:[%s2 + $0x1e8] sm:$0xff]
    %v254 = vld [vmem:[%s2 + $0x1f0] sm:$0xff]
    %v255 = vld [vmem:[%s2 + $0x1f8] sm:$0xff]
    %256 = vmatprep.subr.mxu0 0.0
    %257 = vmatpush1.msra.mxu0 %v207
    %258 = vmatprep.subr.mxu0 0.0
    %259 = vmatpush1.msra.mxu0 %v206
    %260 = vmatprep.subr.mxu0 0.0
    %261 = vmatpush1.msra.mxu0 %v205
    %262 = vmatprep.subr.mxu0 0.0
    %263 = vmatpush1.msra.mxu0 %v204
    %264 = vmatprep.subr.mxu0 0.0
    %265 = vmatpush1.msra.mxu0 %v203
    %266 = vmatprep.subr.mxu0 0.0
    %267 = vmatpush1.msra.mxu0 %v202
    %268 = vmatprep.subr.mxu0 0.0
    %269 = vmatpush1.msra.mxu0 %v201
    %270 = vmatprep.subr.mxu0 0.0
    %271 = vmatpush1.msra.mxu0 %v200
    %272 = vmatprep.subr.mxu0 0.0
    %273 = vmatpush1.msra.mxu0 %v199
    %274 = vmatprep.subr.mxu0 0.0
    %275 = vmatpush1.msra.mxu0 %v198
    %276 = vmatprep.subr.mxu0 0.0
    %277 = vmatpush1.msra.mxu0 %v197
    %278 = vmatprep.subr.mxu0 0.0
    %279 = vmatpush1.msra.mxu0 %v196
    %280 = vmatprep.subr.mxu0 0.0
    %281 = vmatpush1.msra.mxu0 %v195
    %282 = vmatprep.subr.mxu0 0.0
    %283 = vmatpush1.msra.mxu0 %v194
    %284 = vmatprep.subr.mxu0 0.0
    %285 = vmatpush1.msra.mxu0 %v193
    %286 = vmatprep.subr.mxu0 0.0
    %287 = vmatpush1.msra.mxu0 %v192
    %288 = vmatprep.subr.mxu0 0.0
    %289 = vmatpush2.msra.mxu0 %v223
    %290 = vmatprep.subr.mxu0 0.0
    %291 = vmatpush2.msra.mxu0 %v222
    %292 = vmatprep.subr.mxu0 0.0
    %293 = vmatpush2.msra.mxu0 %v221
    %294 = vmatprep.subr.mxu0 0.0
    %295 = vmatpush2.msra.mxu0 %v220
    %296 = vmatprep.subr.mxu0 0.0
    %297 = vmatpush2.msra.mxu0 %v219
    %298 = vmatprep.subr.mxu0 0.0
    %299 = vmatpush2.msra.mxu0 %v218
    %300 = vmatprep.subr.mxu0 0.0
    %301 = vmatpush2.msra.mxu0 %v217
    %302 = vmatprep.subr.mxu0 0.0
    %303 = vmatpush2.msra.mxu0 %v216
    %304 = vmatprep.subr.mxu0 0.0
    %305 = vmatpush2.msra.mxu0 %v215
    %306 = vmatprep.subr.mxu0 0.0
    %307 = vmatpush2.msra.mxu0 %v214
    %308 = vmatprep.subr.mxu0 0.0
    %309 = vmatpush2.msra.mxu0 %v213
    %310 = vmatprep.subr.mxu0 0.0
    %311 = vmatpush2.msra.mxu0 %v212
    %312 = vmatprep.subr.mxu0 0.0
    %313 = vmatpush2.msra.mxu0 %v211
    %314 = vmatprep.subr.mxu0 0.0
    %315 = vmatpush2.msra.mxu0 %v210
    %316 = vmatprep.subr.mxu0 0.0
    %317 = vmatpush2.msra.mxu0 %v209
    %318 = vmatprep.subr.mxu0 0.0
    %319 = vmatpush2.msra.mxu0 %v208
    %320 = vmatprep.mubr.f32.mxu0 %v147
    %321 = vmatmul.mubr.f32.gmra.mxu0 %v145
    %v322 = vpop.f32.mrf.mxu0
    %v323 = vadd.f32 0.0, %v322
    %v324 = vpop.f32.mrf.mxu0
    %325 = vdwg.mxu0
    %326 = vmatprep.subr.mxu0 0.0
    %327 = vmatpush1.msra.mxu0 %v239
    %328 = vmatprep.subr.mxu0 0.0
    %329 = vmatpush1.msra.mxu0 %v238
    %330 = vmatprep.subr.mxu0 0.0
    %331 = vmatpush1.msra.mxu0 %v237
    %332 = vmatprep.subr.mxu0 0.0
    %333 = vmatpush1.msra.mxu0 %v236
    %334 = vmatprep.subr.mxu0 0.0
    %335 = vmatpush1.msra.mxu0 %v235
    %336 = vmatprep.subr.mxu0 0.0
    %337 = vmatpush1.msra.mxu0 %v234
    %338 = vmatprep.subr.mxu0 0.0
    %339 = vmatpush1.msra.mxu0 %v233
    %340 = vmatprep.subr.mxu0 0.0
    %341 = vmatpush1.msra.mxu0 %v232
    %342 = vmatprep.subr.mxu0 0.0
    %343 = vmatpush1.msra.mxu0 %v231
    %344 = vmatprep.subr.mxu0 0.0
    %345 = vmatpush1.msra.mxu0 %v230
    %346 = vmatprep.subr.mxu0 0.0
    %347 = vmatpush1.msra.mxu0 %v229
    %348 = vmatprep.subr.mxu0 0.0
    %349 = vmatpush1.msra.mxu0 %v228
    %350 = vmatprep.subr.mxu0 0.0
    %351 = vmatpush1.msra.mxu0 %v227
    %352 = vmatprep.subr.mxu0 0.0
    %353 = vmatpush1.msra.mxu0 %v226
    %354 = vmatprep.subr.mxu0 0.0
    %355 = vmatpush1.msra.mxu0 %v225
    %356 = vmatprep.subr.mxu0 0.0
    %357 = vmatpush1.msra.mxu0 %v224
    %358 = vmatprep.subr.mxu0 0.0
    %359 = vmatpush2.msra.mxu0 %v255
    %360 = vmatprep.subr.mxu0 0.0
    %361 = vmatpush2.msra.mxu0 %v254
    %362 = vmatprep.subr.mxu0 0.0
    %363 = vmatpush2.msra.mxu0 %v253
    %364 = vmatprep.subr.mxu0 0.0
    %365 = vmatpush2.msra.mxu0 %v252
    %366 = vmatprep.subr.mxu0 0.0
    %367 = vmatpush2.msra.mxu0 %v251
    %368 = vmatprep.subr.mxu0 0.0
    %369 = vmatpush2.msra.mxu0 %v250
    %370 = vmatprep.subr.mxu0 0.0
    %371 = vmatpush2.msra.mxu0 %v249
    %372 = vmatprep.subr.mxu0 0.0
    %373 = vmatpush2.msra.mxu0 %v248
    %374 = vmatprep.subr.mxu0 0.0
    %375 = vmatpush2.msra.mxu0 %v247
    %376 = vmatprep.subr.mxu0 0.0
    %377 = vmatpush2.msra.mxu0 %v246
    %378 = vmatprep.subr.mxu0 0.0
    %379 = vmatpush2.msra.mxu0 %v245
    %380 = vmatprep.subr.mxu0 0.0
    %381 = vmatpush2.msra.mxu0 %v244
    %382 = vmatprep.subr.mxu0 0.0
    %383 = vmatpush2.msra.mxu0 %v243
    %384 = vmatprep.subr.mxu0 0.0
    %385 = vmatpush2.msra.mxu0 %v242
    %386 = vmatprep.subr.mxu0 0.0
    %387 = vmatpush2.msra.mxu0 %v241
    %388 = vmatprep.subr.mxu0 0.0
    %389 = vmatpush2.msra.mxu0 %v240
    %390 = vmatprep.mubr.f32.mxu0 %v188
    %391 = vmatmul.mubr.f32.gmra.mxu0 %v186
    %v392 = vpop.f32.mrf.mxu0
    %v393 = vadd.f32 %v323, %v392
    %v394 = vpop.f32.mrf.mxu0
    %395 = vdwg.mxu0
    %v396 = vmul.f32 %v393, 0.0025510204
    %398 = vset.pattern.permute.xlu0 32
    %399 = vperm.xlu0 %398, %v396
    %v400 = vpop.permute.xlu0 %399
    %v402 = vsub.f32 %v145, %v400
    %v403 = vsub.f32 %v147, %v400
    %v404 = vsub.f32 %v186, %v400
    %v405 = vsub.f32 %v188, %v400
    %v406 = vmul.f32 %v402, %v402
    %v407 = vmul.f32 %v403, %v403
    %v408 = vmul.f32 %v404, %v404
    %v409 = vmul.f32 %v405, %v405
    %474 = vrot.lane.b32.xlu0 %v192, 96
    %v475 = vpop.permute.xlu0 %474
    %476 = vrot.lane.b32.xlu0 %v193, 96
    %v477 = vpop.permute.xlu0 %476
    %478 = vrot.lane.b32.xlu0 %v194, 96
    %v479 = vpop.permute.xlu0 %478
    %480 = vrot.lane.b32.xlu0 %v195, 96
    %v481 = vpop.permute.xlu0 %480
    %482 = vrot.lane.b32.xlu0 %v196, 96
    %v483 = vpop.permute.xlu0 %482
    %484 = vrot.lane.b32.xlu0 %v197, 96
    %v485 = vpop.permute.xlu0 %484
    %486 = vrot.lane.b32.xlu0 %v198, 96
    %v487 = vpop.permute.xlu0 %486
    %488 = vrot.lane.b32.xlu0 %v199, 96
    %v489 = vpop.permute.xlu0 %488
    %490 = vrot.lane.b32.xlu0 %v200, 96
    %v491 = vpop.permute.xlu0 %490
    %492 = vrot.lane.b32.xlu0 %v201, 96
    %v493 = vpop.permute.xlu0 %492
    %494 = vrot.lane.b32.xlu0 %v202, 96
    %v495 = vpop.permute.xlu0 %494
    %496 = vrot.lane.b32.xlu0 %v203, 96
    %v497 = vpop.permute.xlu0 %496
    %498 = vrot.lane.b32.xlu0 %v204, 96
    %v499 = vpop.permute.xlu0 %498
    %500 = vrot.lane.b32.xlu0 %v205, 96
    %v501 = vpop.permute.xlu0 %500
    %502 = vrot.lane.b32.xlu0 %v206, 96
    %v503 = vpop.permute.xlu0 %502
    %504 = vrot.lane.b32.xlu0 %v207, 96
    %v505 = vpop.permute.xlu0 %504
    %506 = vrot.lane.b32.xlu0 %v208, 96
    %v507 = vpop.permute.xlu0 %506
    %508 = vrot.lane.b32.xlu0 %v209, 96
    %v509 = vpop.permute.xlu0 %508
    %510 = vrot.lane.b32.xlu0 %v210, 96
    %v511 = vpop.permute.xlu0 %510
    %512 = vrot.lane.b32.xlu0 %v211, 96
    %v513 = vpop.permute.xlu0 %512
    %514 = vrot.lane.b32.xlu0 %v212, 96
    %v515 = vpop.permute.xlu0 %514
    %516 = vrot.lane.b32.xlu0 %v213, 96
    %v517 = vpop.permute.xlu0 %516
    %518 = vrot.lane.b32.xlu0 %v214, 96
    %v519 = vpop.permute.xlu0 %518
    %520 = vrot.lane.b32.xlu0 %v215, 96
    %v521 = vpop.permute.xlu0 %520
    %522 = vrot.lane.b32.xlu0 %v216, 96
    %v523 = vpop.permute.xlu0 %522
    %524 = vrot.lane.b32.xlu0 %v217, 96
    %v525 = vpop.permute.xlu0 %524
    %526 = vrot.lane.b32.xlu0 %v218, 96
    %v527 = vpop.permute.xlu0 %526
    %528 = vrot.lane.b32.xlu0 %v219, 96
    %v529 = vpop.permute.xlu0 %528
    %530 = vrot.lane.b32.xlu0 %v220, 96
    %v531 = vpop.permute.xlu0 %530
    %532 = vrot.lane.b32.xlu0 %v221, 96
    %v533 = vpop.permute.xlu0 %532
    %534 = vrot.lane.b32.xlu0 %v222, 96
    %v535 = vpop.permute.xlu0 %534
    %536 = vrot.lane.b32.xlu0 %v223, 96
    %v537 = vpop.permute.xlu0 %536
    %538 = vrot.lane.b32.xlu0 %v224, 96
    %v539 = vpop.permute.xlu0 %538
    %540 = vrot.lane.b32.xlu0 %v225, 96
    %v541 = vpop.permute.xlu0 %540
    %542 = vrot.lane.b32.xlu0 %v226, 96
    %v543 = vpop.permute.xlu0 %542
    %544 = vrot.lane.b32.xlu0 %v227, 96
    %v545 = vpop.permute.xlu0 %544
    %546 = vrot.lane.b32.xlu0 %v228, 96
    %v547 = vpop.permute.xlu0 %546
    %548 = vrot.lane.b32.xlu0 %v229, 96
    %v549 = vpop.permute.xlu0 %548
    %550 = vrot.lane.b32.xlu0 %v230, 96
    %v551 = vpop.permute.xlu0 %550
    %552 = vrot.lane.b32.xlu0 %v231, 96
    %v553 = vpop.permute.xlu0 %552
    %554 = vrot.lane.b32.xlu0 %v232, 96
    %v555 = vpop.permute.xlu0 %554
    %556 = vrot.lane.b32.xlu0 %v233, 96
    %v557 = vpop.permute.xlu0 %556
    %558 = vrot.lane.b32.xlu0 %v234, 96
    %v559 = vpop.permute.xlu0 %558
    %560 = vrot.lane.b32.xlu0 %v235, 96
    %v561 = vpop.permute.xlu0 %560
    %562 = vrot.lane.b32.xlu0 %v236, 96
    %v563 = vpop.permute.xlu0 %562
    %564 = vrot.lane.b32.xlu0 %v237, 96
    %v565 = vpop.permute.xlu0 %564
    %566 = vrot.lane.b32.xlu0 %v238, 96
    %v567 = vpop.permute.xlu0 %566
    %568 = vrot.lane.b32.xlu0 %v239, 96
    %v569 = vpop.permute.xlu0 %568
    %570 = vrot.lane.b32.xlu0 %v240, 96
    %v571 = vpop.permute.xlu0 %570
    %572 = vrot.lane.b32.xlu0 %v241, 96
    %v573 = vpop.permute.xlu0 %572
    %574 = vrot.lane.b32.xlu0 %v242, 96
    %v575 = vpop.permute.xlu0 %574
    %576 = vrot.lane.b32.xlu0 %v243, 96
    %v577 = vpop.permute.xlu0 %576
    %578 = vrot.lane.b32.xlu0 %v244, 96
    %v579 = vpop.permute.xlu0 %578
    %580 = vrot.lane.b32.xlu0 %v245, 96
    %v581 = vpop.permute.xlu0 %580
    %582 = vrot.lane.b32.xlu0 %v246, 96
    %v583 = vpop.permute.xlu0 %582
    %584 = vrot.lane.b32.xlu0 %v247, 96
    %v585 = vpop.permute.xlu0 %584
    %586 = vrot.lane.b32.xlu0 %v248, 96
    %v587 = vpop.permute.xlu0 %586
    %588 = vrot.lane.b32.xlu0 %v249, 96
    %v589 = vpop.permute.xlu0 %588
    %590 = vrot.lane.b32.xlu0 %v250, 96
    %v591 = vpop.permute.xlu0 %590
    %592 = vrot.lane.b32.xlu0 %v251, 96
    %v593 = vpop.permute.xlu0 %592
    %594 = vrot.lane.b32.xlu0 %v252, 96
    %v595 = vpop.permute.xlu0 %594
    %596 = vrot.lane.b32.xlu0 %v253, 96
    %v597 = vpop.permute.xlu0 %596
    %598 = vrot.lane.b32.xlu0 %v254, 96
    %v599 = vpop.permute.xlu0 %598
    %600 = vrot.lane.b32.xlu0 %v255, 96
    %v601 = vpop.permute.xlu0 %600
    %666 = vmatprep.subr.mxu0 0.0
    %667 = vmatpush1.msra.mxu0 %v505
    %668 = vmatprep.subr.mxu0 0.0
    %669 = vmatpush1.msra.mxu0 %v503
    %670 = vmatprep.subr.mxu0 0.0
    %671 = vmatpush1.msra.mxu0 %v501
    %672 = vmatprep.subr.mxu0 0.0
    %673 = vmatpush1.msra.mxu0 %v499
    %674 = vmatprep.subr.mxu0 0.0
    %675 = vmatpush1.msra.mxu0 %v497
    %676 = vmatprep.subr.mxu0 0.0
    %677 = vmatpush1.msra.mxu0 %v495
    %678 = vmatprep.subr.mxu0 0.0
    %679 = vmatpush1.msra.mxu0 %v493
    %680 = vmatprep.subr.mxu0 0.0
    %681 = vmatpush1.msra.mxu0 %v491
    %682 = vmatprep.subr.mxu0 0.0
    %683 = vmatpush1.msra.mxu0 %v489
    %684 = vmatprep.subr.mxu0 0.0
    %685 = vmatpush1.msra.mxu0 %v487
    %686 = vmatprep.subr.mxu0 0.0
    %687 = vmatpush1.msra.mxu0 %v485
    %688 = vmatprep.subr.mxu0 0.0
    %689 = vmatpush1.msra.mxu0 %v483
    %690 = vmatprep.subr.mxu0 0.0
    %691 = vmatpush1.msra.mxu0 %v481
    %692 = vmatprep.subr.mxu0 0.0
    %693 = vmatpush1.msra.mxu0 %v479
    %694 = vmatprep.subr.mxu0 0.0
    %695 = vmatpush1.msra.mxu0 %v477
    %696 = vmatprep.subr.mxu0 0.0
    %697 = vmatpush1.msra.mxu0 %v475
    %698 = vmatprep.subr.mxu0 0.0
    %699 = vmatpush2.msra.mxu0 %v537
    %700 = vmatprep.subr.mxu0 0.0
    %701 = vmatpush2.msra.mxu0 %v535
    %702 = vmatprep.subr.mxu0 0.0
    %703 = vmatpush2.msra.mxu0 %v533
    %704 = vmatprep.subr.mxu0 0.0
    %705 = vmatpush2.msra.mxu0 %v531
    %706 = vmatprep.subr.mxu0 0.0
    %707 = vmatpush2.msra.mxu0 %v529
    %708 = vmatprep.subr.mxu0 0.0
    %709 = vmatpush2.msra.mxu0 %v527
    %710 = vmatprep.subr.mxu0 0.0
    %711 = vmatpush2.msra.mxu0 %v525
    %712 = vmatprep.subr.mxu0 0.0
    %713 = vmatpush2.msra.mxu0 %v523
    %714 = vmatprep.subr.mxu0 0.0
    %715 = vmatpush2.msra.mxu0 %v521
    %716 = vmatprep.subr.mxu0 0.0
    %717 = vmatpush2.msra.mxu0 %v519
    %718 = vmatprep.subr.mxu0 0.0
    %719 = vmatpush2.msra.mxu0 %v517
    %720 = vmatprep.subr.mxu0 0.0
    %721 = vmatpush2.msra.mxu0 %v515
    %722 = vmatprep.subr.mxu0 0.0
    %723 = vmatpush2.msra.mxu0 %v513
    %724 = vmatprep.subr.mxu0 0.0
    %725 = vmatpush2.msra.mxu0 %v511
    %726 = vmatprep.subr.mxu0 0.0
    %727 = vmatpush2.msra.mxu0 %v509
    %728 = vmatprep.subr.mxu0 0.0
    %729 = vmatpush2.msra.mxu0 %v507
    %730 = vmatprep.mubr.f32.mxu0 %v407
    %731 = vmatmul.mubr.f32.gmra.mxu0 %v406
    %v732 = vpop.f32.mrf.mxu0
    %v733 = vadd.f32 0.0, %v732
    %v734 = vpop.f32.mrf.mxu0
    %735 = vdwg.mxu0
    %736 = vmatprep.subr.mxu0 0.0
    %737 = vmatpush1.msra.mxu0 %v569
    %738 = vmatprep.subr.mxu0 0.0
    %739 = vmatpush1.msra.mxu0 %v567
    %740 = vmatprep.subr.mxu0 0.0
    %741 = vmatpush1.msra.mxu0 %v565
    %742 = vmatprep.subr.mxu0 0.0
    %743 = vmatpush1.msra.mxu0 %v563
    %744 = vmatprep.subr.mxu0 0.0
    %745 = vmatpush1.msra.mxu0 %v561
    %746 = vmatprep.subr.mxu0 0.0
    %747 = vmatpush1.msra.mxu0 %v559
    %748 = vmatprep.subr.mxu0 0.0
    %749 = vmatpush1.msra.mxu0 %v557
    %750 = vmatprep.subr.mxu0 0.0
    %751 = vmatpush1.msra.mxu0 %v555
    %752 = vmatprep.subr.mxu0 0.0
    %753 = vmatpush1.msra.mxu0 %v553
    %754 = vmatprep.subr.mxu0 0.0
    %755 = vmatpush1.msra.mxu0 %v551
    %756 = vmatprep.subr.mxu0 0.0
    %757 = vmatpush1.msra.mxu0 %v549
    %758 = vmatprep.subr.mxu0 0.0
    %759 = vmatpush1.msra.mxu0 %v547
    %760 = vmatprep.subr.mxu0 0.0
    %761 = vmatpush1.msra.mxu0 %v545
    %762 = vmatprep.subr.mxu0 0.0
    %763 = vmatpush1.msra.mxu0 %v543
    %764 = vmatprep.subr.mxu0 0.0
    %765 = vmatpush1.msra.mxu0 %v541
    %766 = vmatprep.subr.mxu0 0.0
    %767 = vmatpush1.msra.mxu0 %v539
    %768 = vmatprep.subr.mxu0 0.0
    %769 = vmatpush2.msra.mxu0 %v601
    %770 = vmatprep.subr.mxu0 0.0
    %771 = vmatpush2.msra.mxu0 %v599
    %772 = vmatprep.subr.mxu0 0.0
    %773 = vmatpush2.msra.mxu0 %v597
    %774 = vmatprep.subr.mxu0 0.0
    %775 = vmatpush2.msra.mxu0 %v595
    %776 = vmatprep.subr.mxu0 0.0
    %777 = vmatpush2.msra.mxu0 %v593
    %778 = vmatprep.subr.mxu0 0.0
    %779 = vmatpush2.msra.mxu0 %v591
    %780 = vmatprep.subr.mxu0 0.0
    %781 = vmatpush2.msra.mxu0 %v589
    %782 = vmatprep.subr.mxu0 0.0
    %783 = vmatpush2.msra.mxu0 %v587
    %784 = vmatprep.subr.mxu0 0.0
    %785 = vmatpush2.msra.mxu0 %v585
    %786 = vmatprep.subr.mxu0 0.0
    %787 = vmatpush2.msra.mxu0 %v583
    %788 = vmatprep.subr.mxu0 0.0
    %789 = vmatpush2.msra.mxu0 %v581
    %790 = vmatprep.subr.mxu0 0.0
    %791 = vmatpush2.msra.mxu0 %v579
    %792 = vmatprep.subr.mxu0 0.0
    %793 = vmatpush2.msra.mxu0 %v577
    %794 = vmatprep.subr.mxu0 0.0
    %795 = vmatpush2.msra.mxu0 %v575
    %796 = vmatprep.subr.mxu0 0.0
    %797 = vmatpush2.msra.mxu0 %v573
    %798 = vmatprep.subr.mxu0 0.0
    %799 = vmatpush2.msra.mxu0 %v571
    %800 = vmatprep.mubr.f32.mxu0 %v409
    %801 = vmatmul.mubr.f32.gmra.mxu0 %v408
    %v802 = vpop.f32.mrf.mxu0
    %v803 = vadd.f32 %v733, %v802
    %v804 = vpop.f32.mrf.mxu0
    %805 = vdwg.mxu0
    %v806 = vmul.f32 %v803, 0.0025510204
    %v807 = vadd.f32 %v806, 1e-05
    %v808 = vrsqrt.pop %v807
    %v809 = vld [vmem:[%s3] sm:$0xf]
    %v810 = vmul.f32 %v809, %v808
    %v811 = vld [vmem:[%s4] sm:$0xf]
    %813 = vrot.lane.b32.xlu0 %v810, 32
    %v814 = vpop.permute.xlu0 %813
    %v816 = vmul.f32 %v396, %v814
    %818 = vrot.lane.b32.xlu0 %v816, 96
    %v819 = vpop.permute.xlu0 %818
    %v821 = vsub.f32 %v811, %v819
    %822 = vset.pattern.permute.xlu0 0
    %823 = vperm.xlu0 %822, %v810
    %v824 = vpop.permute.xlu0 %823
    %v826 = vmul.f32 %v393, %v824
    %828 = vset.pattern.permute.xlu0 0
    %829 = vperm.xlu0 %828, %v821
    %v830 = vpop.permute.xlu0 %829
    %v832 = vadd.f32 %v826, %v830
    %vm833 = vcmask 257024
    %834 = vst.msk [vmem:[#allocation2] sm:$0xf] %vm833, %v832
    // Predicated region
    $region22: #{tpu_custom_call.1} parent=1 // pred_check
      _
    $region23: #{tpu_custom_call.1} parent=1 // pred_check_branch
      %836 = sbr.rel (0) target = $region25
    $region24: #{tpu_custom_call.1} parent=1 // pred_region
      %s838 = ssub.s32 64, 64
      %839 = vsyncadd [#allocation3], %s838
      %s841 = sshll.u32 [#allocation2], 4
      %s842 = int_to_ptr.vmem [resolvable:$true] %s841
      %844 = dma.vmem_to_hbm [thread:$0]  %s842, 64, %s5, [#allocation3]
    $region25: #{tpu_custom_call.1} parent=1 // pred_fallthru
      _
    // Predicated region
    $region26: #{tpu_custom_call.1} parent=1 // pred_check
      _
    $region27: #{tpu_custom_call.1} parent=1 // pred_check_branch
      %846 = sbr.rel (0) target = $region29
    $region28: #{tpu_custom_call.1} parent=1 // pred_region
      %847 = dma.done [#allocation3], 64
    $region29: #{tpu_custom_call.1} parent=1 // pred_fallthru
      _
    %848 = vsyncpa [#allocation3], 1

</llo_original>
